<compile_context>
chip_gen: v7x
topology: tpu7x:2x2x1
jax: 0.10.0
libtpu: 0.0.40
codegen_flags: <defaults>
</compile_context>

<pallas_src>
import math

import jax
import jax.numpy as jnp
from jax.experimental import pallas as pl
from jax.experimental.pallas import tpu as pltpu


def time_embedding_kernel(x_ref, freq_ref, phase_ref, o_ref):
    # x_ref / o_ref: (tR, W) tile.  freq_ref / phase_ref: (1, W), broadcast over rows.
    x = x_ref[...]
    o_ref[...] = jnp.cos(x * freq_ref[...] - phase_ref[...]).astype(o_ref.dtype)


def _choose_layout(n_elems: int, dim: int):
    """Pick a lane-dense row width W (multiple of 128 and of dim) and row count R."""
    base = dim * 128 // math.gcd(dim, 128)  # lcm(dim, 128)
    if n_elems % base != 0:
        # Fallback: keep last dim == dim (still correct; just not lane-dense).
        return n_elems // dim, dim
    w = base
    while w * 2 <= min(n_elems, 4096) and n_elems % (w * 2) == 0:
        w *= 2
    return n_elems // w, w


def _choose_row_tile(n_rows: int, width: int, target_bytes: int = 2 << 20):
    """Rows per block: ~target_bytes per buffer, multiple of 8 (or full extent)."""
    rows = max(1, target_bytes // (width * 4))
    if rows >= n_rows:
        return n_rows
    return max(8, (rows // 8) * 8)


def time_embedding(x: jax.Array, dim: int) -> jax.Array:
    """x: (B, S, dim) float32 -> (B, S, dim) float32 (matches the PyTorch module)."""
    B, S, D = x.shape
    assert D == dim and dim % 2 == 0

    # Buffers matching nn.Module __init__ (deterministic).
    inv_freq = jnp.exp(
        jnp.arange(0, dim, 2, dtype=jnp.float32) * (-math.log(10000.0) / dim)
    )                                                                   # (dim//2,)
    freq_d = jnp.repeat(inv_freq, 2)                                    # (D,) even/odd dup
    phase_d = jnp.tile(jnp.array([math.pi / 2.0, 0.0], jnp.float32), D // 2)  # (D,)

    n_elems = B * S * D
    R, W = _choose_layout(n_elems, D)
    reps = W // D
    freq_row = jnp.tile(freq_d, reps).reshape(1, W)
    phase_row = jnp.tile(phase_d, reps).reshape(1, W)

    x2 = x.reshape(R, W)
    tR = _choose_row_tile(R, W)
    grid = (pl.cdiv(R, tR),)

    out2 = pl.pallas_call(
        time_embedding_kernel,
        out_shape=jax.ShapeDtypeStruct((R, W), x.dtype),
        grid_spec=pltpu.PrefetchScalarGridSpec(
            num_scalar_prefetch=0,
            grid=grid,
            in_specs=[
                pl.BlockSpec((tR, W), lambda i: (i, 0)),   # x rows
                pl.BlockSpec((1, W), lambda i: (0, 0)),    # freq (shared, tiny)
                pl.BlockSpec((1, W), lambda i: (0, 0)),    # phase (shared, tiny)
            ],
            out_specs=pl.BlockSpec((tR, W), lambda i: (i, 0)),
        ),
        compiler_params=pltpu.CompilerParams(
            dimension_semantics=("parallel",),
        ),
        cost_estimate=pl.CostEstimate(
            flops=2 * n_elems,
            transcendentals=n_elems,
            bytes_accessed=8 * n_elems + 8 * W,
        ),
    )(x2, freq_row, phase_row)

    return out2.reshape(B, S, D)


def time_embedding_ref(x: jax.Array, dim: int) -> jax.Array:
    """Pure-JAX reference mirroring the PyTorch code (strided even/odd writes)."""
    inv_freq = jnp.exp(
        jnp.arange(0, dim, 2, dtype=jnp.float32) * (-math.log(10000.0) / dim)
    )
    out = jnp.zeros_like(x)
    out = out.at[:, :, 0::2].set(jnp.sin(x[:, :, 0::2] * inv_freq))
    out = out.at[:, :, 1::2].set(jnp.cos(x[:, :, 1::2] * inv_freq))
    return out


if __name__ == "__main__":
    B, S, DIM = 2, 8, 32
    key = jax.random.PRNGKey(0)
    # Typical usage feeds broadcast timesteps, but any (B, S, DIM) tensor is valid.
    x = jax.random.uniform(key, (B, S, DIM), dtype=jnp.float32) * 100.0

    out = time_embedding(x, DIM)
    out = jax.block_until_ready(out)

    ref = time_embedding_ref(x, DIM)
    assert out.shape == (B, S, DIM)
    # cos(z - pi/2) differs from sin(z) by a few ULPs at |z| ~ 100; tolerance reflects that.
    assert jnp.allclose(out, ref, atol=5e-5, rtol=1e-5), float(jnp.abs(out - ref).max())

    print("KERNEL_OK")
</pallas_src>

<mosaic_0001>
module attributes {stable_mosaic.version = 11 : i64} {
  func.func @time_embedding_kernel(%arg0: i32, %arg1: memref<1x512xf32, #tpu.memory_space<vmem>>, %arg2: memref<1x512xf32, #tpu.memory_space<vmem>>, %arg3: memref<1x512xf32, #tpu.memory_space<vmem>>, %arg4: memref<1x512xf32, #tpu.memory_space<vmem>>) attributes {dimension_semantics = [#tpu.dimension_semantics<parallel>], iteration_bounds = array<i64: 1>, scalar_prefetch = 0 : i64, scratch_operands = 0 : i64, tpu.core_type = #tpu.core_type<tc>, window_params = [{transform_indices = @transform_0, window_bounds = array<i64: 1, 512>}, {pipeline_mode = #tpu.pipeline_mode<synchronous>, transform_indices = @transform_1, window_bounds = array<i64: 1, 512>}, {pipeline_mode = #tpu.pipeline_mode<synchronous>, transform_indices = @transform_2, window_bounds = array<i64: 1, 512>}, {transform_indices = @transform_3, window_bounds = array<i64: 1, 512>}]} {
    %c0 = arith.constant 0 : index
    %c0_0 = arith.constant 0 : index
    %0 = vector.load %arg1[%c0, %c0_0] : memref<1x512xf32, #tpu.memory_space<vmem>>, vector<1x512xf32>
    %c0_1 = arith.constant 0 : index
    %c0_2 = arith.constant 0 : index
    %1 = vector.load %arg2[%c0_1, %c0_2] : memref<1x512xf32, #tpu.memory_space<vmem>>, vector<1x512xf32>
    %2 = arith.mulf %0, %1 : vector<1x512xf32>
    %c0_3 = arith.constant 0 : index
    %c0_4 = arith.constant 0 : index
    %3 = vector.load %arg3[%c0_3, %c0_4] : memref<1x512xf32, #tpu.memory_space<vmem>>, vector<1x512xf32>
    %4 = arith.subf %2, %3 : vector<1x512xf32>
    %5 = math.cos %4 : vector<1x512xf32>
    %c0_5 = arith.constant 0 : index
    %c0_6 = arith.constant 0 : index
    %6 = vector.load %arg4[%c0_5, %c0_6] : memref<1x512xf32, #tpu.memory_space<vmem>>, vector<1x512xf32>
    tpu.vector_store %arg4[%c0_5, %c0_6], %5 {strides = array<i32>} : memref<1x512xf32, #tpu.memory_space<vmem>>, vector<1x512xf32>,
    return
  }
  func.func @transform_0(%arg0: i32) -> (i32, i32) {
    %c0_i32 = arith.constant 0 : i32
    %c0_i32_0 = arith.constant 0 : i32
    return %arg0, %c0_i32 : i32, i32
  }
  func.func @transform_1(%arg0: i32) -> (i32, i32) {
    %c0_i32 = arith.constant 0 : i32
    %c0_i32_0 = arith.constant 0 : i32
    %c0_i32_1 = arith.constant 0 : i32
    return %c0_i32, %c0_i32_0 : i32, i32
  }
  func.func @transform_2(%arg0: i32) -> (i32, i32) {
    %c0_i32 = arith.constant 0 : i32
    %c0_i32_0 = arith.constant 0 : i32
    %c0_i32_1 = arith.constant 0 : i32
    return %c0_i32, %c0_i32_0 : i32, i32
  }
  func.func @transform_3(%arg0: i32) -> (i32, i32) {
    %c0_i32 = arith.constant 0 : i32
    %c0_i32_0 = arith.constant 0 : i32
    return %arg0, %c0_i32 : i32, i32
  }
}

</mosaic_0001>

<llo_original>
// kernel: tpu_custom_call.1
$region0: #{tpu_custom_call.1}
  #allocation0 [shape = 'u32[]', space=smem, size = 0x4, offset = 0x4, fixed_abs, tag = 'smem constant byte address 0x4 - core index']
  #allocation1 [shape = 'u32[144,128]{1,0:T(1,128)}', space=vmem, size = 0x12000, scoped, tag = 'internal scratch']
  %s0 = inlined_call_operand.hbm [shape: f32[1,512], index: 0, kind: input, shape index: {}]
  %s1 = inlined_call_operand.hbm [shape: f32[1,512], index: 1, kind: input, shape index: {}]
  %s2 = inlined_call_operand.vmem [shape: f32[1,512], index: 2, kind: input, shape index: {}]
  %s3 = inlined_call_operand.hbm [shape: f32[1,512], index: 3, kind: output, shape index: {}]
  %s4 = sld [smem:[#allocation0]]
  $region30: #{tpu_custom_call.1} parent=0
    _
  %s6 = ssub.s32 1, %s4
  %s7 = scalar_select 0, %s6, %s4
  $region1: #{tpu_custom_call.1} parent=0
    #allocation2 [shape = 'u8[2048]{0}', space=vmem, size = 0x800, scoped, tag = 'input window, operand 0, single buffered']
    #allocation3 [shape = 's32[1]{0}', space=sflag, size = 0x4, scoped, tag = 'scoped memory for tpu_custom_call.1']
    #allocation4 [shape = 's32[1]{0}', space=sflag, size = 0x4, scoped, tag = 'scoped memory for tpu_custom_call.1']
    #allocation5 [shape = 'u8[2048]{0}', space=vmem, size = 0x800, scoped, tag = 'input window, operand 1, single buffered']
    #allocation6 [shape = 's32[1]{0}', space=sflag, size = 0x4, scoped, tag = 'scoped memory for tpu_custom_call.1']
    #allocation7 [shape = 'u8[2048]{0}', space=vmem, size = 0x800, scoped, tag = 'output window, operand 0, single buffered']
    %8 = vsyncpa [#allocation3], 0
    %9 = vsyncpa [#allocation6], 0
    %10 = vsyncpa [#allocation4], 0
    // Predicated region
    $region2: #{tpu_custom_call.1} parent=1 // pred_check
      _
    $region3: #{tpu_custom_call.1} parent=1 // pred_check_branch
      %12 = sbr.rel (0) target = $region5
    $region4: #{tpu_custom_call.1} parent=1 // pred_region
      %s14 = ssub.s32 64, 64
      %15 = vsyncadd [#allocation3], %s14
      %s17 = sshll.u32 [#allocation2], 4
      %s18 = int_to_ptr.vmem [resolvable:$true] %s17
      %20 = dma.hbm_to_vmem [thread:$0]  %s0, 64, %s18, [#allocation3]
    $region5: #{tpu_custom_call.1} parent=1 // pred_fallthru
      _
    // Predicated region
    $region6: #{tpu_custom_call.1} parent=1 // pred_check
      _
    $region7: #{tpu_custom_call.1} parent=1 // pred_check_branch
      %22 = sbr.rel (0) target = $region9
    $region8: #{tpu_custom_call.1} parent=1 // pred_region
      %s24 = ssub.s32 64, 64
      %25 = vsyncadd [#allocation6], %s24
      %s27 = sshll.u32 [#allocation5], 4
      %s28 = int_to_ptr.vmem [resolvable:$true] %s27
      %30 = dma.hbm_to_vmem [thread:$0]  %s1, 64, %s28, [#allocation6]
    $region9: #{tpu_custom_call.1} parent=1 // pred_fallthru
      _
    // Predicated region
    $region10: #{tpu_custom_call.1} parent=1 // pred_check
      _
    $region11: #{tpu_custom_call.1} parent=1 // pred_check_branch
      %32 = sbr.rel (0) target = $region13
    $region12: #{tpu_custom_call.1} parent=1 // pred_region
      _
    $region13: #{tpu_custom_call.1} parent=1 // pred_fallthru
      _
    // Predicated region
    $region14: #{tpu_custom_call.1} parent=1 // pred_check
      _
    $region15: #{tpu_custom_call.1} parent=1 // pred_check_branch
      %34 = sbr.rel (0) target = $region17
    $region16: #{tpu_custom_call.1} parent=1 // pred_region
      %35 = dma.done [#allocation3], 64
    $region17: #{tpu_custom_call.1} parent=1 // pred_fallthru
      _
    // Predicated region
    $region18: #{tpu_custom_call.1} parent=1 // pred_check
      _
    $region19: #{tpu_custom_call.1} parent=1 // pred_check_branch
      %37 = sbr.rel (0) target = $region21
    $region20: #{tpu_custom_call.1} parent=1 // pred_region
      %38 = dma.done [#allocation6], 64
    $region21: #{tpu_custom_call.1} parent=1 // pred_fallthru
      _
    %v39 = vld [vmem:[#allocation2] sm:$0xf]
    %v40 = vld [vmem:[#allocation5] sm:$0xf]
    %v41 = vmul.f32 %v39, %v40
    %v42 = vld [vmem:[%s2] sm:$0xf]
    %v43 = vsub.f32 %v41, %v42
    %v44 = vand.u32 2147483647, %v43
    %vm45 = vcmp.le.f32.partialorder %v44, 0.7853982
    %vm46 = vcmp.lt.s32.totalorder %v43, 0
    %v47 = vand.u32 %v43, 2139095040
    %v48 = vshrl.u32 %v47, 23
    %v49 = vsub.s32 %v48, 127
    %v50 = vand.u32 2147483647, %v43
    %v51 = vand.u32 %v50, 8388607
    %v52 = vor.u32 %v51, 8388608
    %v53 = vsub.s32 0, %v52
    %v54 = vadd.s32 %v49, 1
    %vm55 = vcmp.gt.s32.totalorder %v54, 0
    %v56 = vsel %vm55, %v54, 0
    %v57 = vshrl.u32 %v56, 5
    %v58 = vand.u32 %v56, 31
    %v59 = vsub.s32 32, %v58
    %v60 = vshrl.u32 683565275, %v59
    %v61 = vshll.u32 683565275, %v58
    %v62 = vshrl.u32 2475754826, %v59
    %v63 = vor.u32 %v61, %v62
    %v64 = vshll.u32 2475754826, %v58
    %v65 = vshrl.u32 2131351028, %v59
    %v66 = vor.u32 %v64, %v65
    %v67 = vshll.u32 2131351028, %v58
    %v68 = vshrl.u32 2102212464, %v59
    %v69 = vor.u32 %v67, %v68
    %v70 = vshll.u32 2102212464, %v58
    %v71 = vshrl.u32 920167782, %v59
    %v72 = vor.u32 %v70, %v71
    %v73 = vshll.u32 920167782, %v58
    %v74 = vshrl.u32 1326507024, %v59
    %v75 = vor.u32 %v73, %v74
    %vm76 = vcmp.lt.s32.totalorder %v57, 1
    %vm77 = vcmp.lt.s32.totalorder %v57, 2
    %vm78 = vcmp.lt.s32.totalorder %v57, 3
    %vm79 = vcmp.lt.s32.totalorder %v57, 4
    %v80 = vsel %vm76, %v60, %v63
    %v81 = vsel %vm79, %v69, 2102212464
    %v82 = vsel %vm78, %v66, %v81
    %v83 = vsel %vm77, %v80, %v82
    %v84 = vsel %vm76, %v63, %v66
    %v85 = vsel %vm79, %v72, 920167782
    %v86 = vsel %vm78, %v69, %v85
    %v87 = vsel %vm77, %v84, %v86
    %v88 = vsel %vm76, %v66, %v69
    %v89 = vsel %vm79, %v75, 1326507024
    %v90 = vsel %vm78, %v72, %v89
    %v91 = vsel %vm77, %v88, %v90
    %v92 = vshll.u32 %v52, 8
    %v93 = vmul.u32.u64.compose %v92, %v91
    %v94 = vextract.low.u32 %v93
    %v95 = vextract.high.u32 %v93
    %v96 = vmul.u32.u64.compose %v92, %v87
    %v97 = vextract.low.u32 %v96
    %v98 = vextract.high.u32 %v96
    %v99 = vmul.u32 %v92, %v83
    %v100 = vadd.s32 %v95, %v97
    %vm101 = vc.u32 %v95, %v97
    %v102 = vadd.s32 %v98, 1
    %v103 = vsel %vm101, %v102, %v98
    %v104 = vadd.s32 %v99, %v103
    %v105 = vadd.s32 %v104, 536870912
    %v106 = vshrl.u32 %v105, 30
    %v107 = vshll.u32 %v106, 30
    %v108 = vsub.s32 %v104, %v107
    %vm109 = vcmp.lt.s32.totalorder %v108, 0
    %v110 = vsub.s32 0, %v108
    %v111 = vsel %vm109, %v110, %v108
    %v112 = vclz %v111
    %v113 = vsub.s32 %v112, 2
    %vm114 = vcmp.gt.s32.totalorder 0, %v113
    %v115 = vsel %vm114, 0, %v113
    %v116 = vsub.s32 32, %v115
    %v117 = vshll.u32 %v108, %v115
    %v118 = vshrl.u32 %v100, %v116
    %v119 = vor.u32 %v117, %v118
    %v120 = vsub.s32 4294967266, %v115
    %v121 = vadd.s32 %v120, 127
    %v122 = vshll.u32 %v121, 23
    %v123 = vor.u32 4788187, %v122
    %v124 = vand.u32 2147483647, %v123
    %v126 = vcvt.s32.f32 %v119
    %v127 = vmul.f32 %v126, %v124
    %v128 = vxor.u32 %v127, 2147483648
    %v129 = vsel %vm46, %v128, %v127
    %v130 = vsub.s32 4, %v106
    %v131 = vsel %vm46, %v130, %v106
    %v132 = vsel %vm45, %v43, %v129
    %v133 = vsel %vm45, 0, %v131
    %v134 = vcosq.f32.pop %v132
    %v135 = vsinq.f32.pop %v132
    %vm136 = vweird.f32 %v43
    %v137 = vand.u32 %v133, 3
    %vm138 = vcmp.lt.s32.totalorder %v137, 2
    %vm139 = vcmp.eq.s32.totalorder %v137, 0
    %v140 = vxor.u32 %v135, 2147483648
    %v141 = vsel %vm139, %v134, %v140
    %vm142 = vcmp.eq.s32.totalorder %v137, 2
    %v143 = vxor.u32 %v134, 2147483648
    %v144 = vsel %vm142, %v143, %v135
    %v145 = vsel %vm138, %v141, %v144
    %v146 = vsel %vm136, nan, %v145
    %v147 = vlaneseq
    %vm148 = vcmp.ge.s32.totalorder %v147, 0
    %vm149 = vcmp.lt.s32.totalorder %v147, 512
    %vm150 = vmand %vm148, %vm149
    %151 = vst.msk [vmem:[#allocation7] sm:$0xf] %vm150, %v146
    // Predicated region
    $region22: #{tpu_custom_call.1} parent=1 // pred_check
      _
    $region23: #{tpu_custom_call.1} parent=1 // pred_check_branch
      %153 = sbr.rel (0) target = $region25
    $region24: #{tpu_custom_call.1} parent=1 // pred_region
      %s155 = ssub.s32 64, 64
      %156 = vsyncadd [#allocation4], %s155
      %s158 = sshll.u32 [#allocation7], 4
      %s159 = int_to_ptr.vmem [resolvable:$true] %s158
      %161 = dma.vmem_to_hbm [thread:$0]  %s159, 64, %s3, [#allocation4]
    $region25: #{tpu_custom_call.1} parent=1 // pred_fallthru
      _
    // Predicated region
    $region26: #{tpu_custom_call.1} parent=1 // pred_check
      _
    $region27: #{tpu_custom_call.1} parent=1 // pred_check_branch
      %163 = sbr.rel (0) target = $region29
    $region28: #{tpu_custom_call.1} parent=1 // pred_region
      %164 = dma.done [#allocation4], 64
    $region29: #{tpu_custom_call.1} parent=1 // pred_fallthru
      _
    %165 = vsyncpa [#allocation3], 1
    %166 = vsyncpa [#allocation6], 1
    %167 = vsyncpa [#allocation4], 1

</llo_original>
